<compile_context>
chip_gen: v7x
topology: tpu7x:2x2x1
jax: 0.10.0
libtpu: 0.0.40
codegen_flags: <defaults>
</compile_context>

<pallas_src>
import functools
import math

import jax
import jax.numpy as jnp
from jax.experimental import pallas as pl
from jax.experimental.pallas import tpu as pltpu


def _rmsnorm_kernel(x_ref, w_ref, o_ref, *, eps):
    # x_ref: (block_rows, hidden), w_ref: (1, hidden), o_ref: (block_rows, hidden)
    x = x_ref[...].astype(jnp.float32)
    w = w_ref[...].astype(jnp.float32)                 # broadcasts over rows
    norm = jnp.mean(x * x, axis=-1, keepdims=True)     # (block_rows, 1)
    inv = jax.lax.rsqrt(norm + eps)                    # EUP rsqrt
    o_ref[...] = (x * inv * w).astype(o_ref.dtype)


def _round_down(x, m):
    return max(m, (x // m) * m)


def _round_up(x, m):
    return ((x + m - 1) // m) * m


def rmsnorm(x, weight, eps=1e-6, block_rows=None):
    """x: (..., hidden), weight: (hidden,). Returns same shape/dtype as x."""
    orig_shape = x.shape
    hidden = orig_shape[-1]
    rows = math.prod(orig_shape[:-1]) if len(orig_shape) > 1 else 1
    x2 = x.reshape(rows, hidden)
    w2 = weight.reshape(1, hidden)

    itemsize = jnp.dtype(x.dtype).itemsize
    w_itemsize = jnp.dtype(weight.dtype).itemsize
    # Dense sublane packing: 8 rows for 32-bit, 16 for 16-bit, 32 for 8-bit.
    sublane = {4: 8, 2: 16, 1: 32}.get(itemsize, 8)

    # Per-generation VMEM capacity (v7x: 64 MiB/TC, v5e/v6e: 128 MiB).
    try:
        vmem_cap = int(pltpu.get_tpu_info().vmem_capacity_bytes)
    except Exception:
        vmem_cap = 64 * 1024 * 1024  # conservative fallback

    row_bytes = hidden * itemsize
    w_bytes = hidden * w_itemsize

    if block_rows is None:
        # Footprint = 2x in block + 2x out block (double-buffered) + weight.
        # Target ~60% of VMEM, capped at 64 MiB so the same tile is safe on v7x.
        total_budget = min(int(vmem_cap * 0.6), 64 * 1024 * 1024)
        br = (total_budget - 2 * w_bytes) // (4 * row_bytes)
        br = _round_down(min(max(br, sublane), 2048), sublane)
        # Keep >=2 row-grid steps when possible so both v7x cores get work.
        if rows > 2 * sublane:
            br = min(br, _round_up(pl.cdiv(rows, 2), sublane))
        block_rows = br

    if block_rows >= rows:
        block_rows = rows          # full-extent block is always a legal tile
    else:
        block_rows = _round_down(block_rows, sublane)

    grid = (pl.cdiv(rows, block_rows),)

    # Scoped-VMEM limit: double-buffered in+out blocks + weight + headroom,
    # never above ~90% of physical VMEM.
    footprint = 4 * block_rows * row_bytes + 2 * w_bytes
    vmem_limit = max(32 * 1024 * 1024, footprint + (12 << 20))
    vmem_limit = min(vmem_limit, int(vmem_cap * 0.9))

    out = pl.pallas_call(
        functools.partial(_rmsnorm_kernel, eps=eps),
        out_shape=jax.ShapeDtypeStruct((rows, hidden), x.dtype),
        grid_spec=pltpu.PrefetchScalarGridSpec(
            num_scalar_prefetch=0,
            grid=grid,
            in_specs=[
                pl.BlockSpec((block_rows, hidden), lambda i: (i, 0)),
                pl.BlockSpec((1, hidden), lambda i: (0, 0)),
            ],
            out_specs=pl.BlockSpec((block_rows, hidden), lambda i: (i, 0)),
        ),
        compiler_params=pltpu.CompilerParams(
            dimension_semantics=("parallel",),
            vmem_limit_bytes=vmem_limit,
        ),
    )(x2, w2)

    return out.reshape(orig_shape)


if __name__ == "__main__":
    key = jax.random.PRNGKey(0)
    batch, seq, hidden = 2, 8, 32
    x = jax.random.normal(key, (batch, seq, hidden), dtype=jnp.float32)
    # Deterministic param init: ones, matching nn.Parameter(torch.ones(hidden_size)).
    weight = jnp.ones((hidden,), dtype=jnp.float32)
    eps = 1e-6

    out = rmsnorm(x, weight, eps=eps)
    out = jax.block_until_ready(out)

    # Reference check (plain JAX) mirroring the PyTorch forward.
    norm = jnp.mean(x ** 2, axis=-1, keepdims=True)
    ref = weight * x / jnp.sqrt(norm + eps)
    assert out.shape == x.shape and out.dtype == x.dtype
    assert jnp.allclose(out, ref, atol=1e-5, rtol=1e-5)

    print("KERNEL_OK")
</pallas_src>

<mosaic_0001>
module attributes {stable_mosaic.version = 11 : i64} {
  func.func @_rmsnorm_kernel(%arg0: i32, %arg1: memref<16x32xf32, #tpu.memory_space<vmem>>, %arg2: memref<1x32xf32, #tpu.memory_space<vmem>>, %arg3: memref<16x32xf32, #tpu.memory_space<vmem>>) attributes {dimension_semantics = [#tpu.dimension_semantics<parallel>], iteration_bounds = array<i64: 1>, scalar_prefetch = 0 : i64, scratch_operands = 0 : i64, tpu.core_type = #tpu.core_type<tc>, window_params = [{transform_indices = @transform_0, window_bounds = array<i64: 16, 32>}, {pipeline_mode = #tpu.pipeline_mode<synchronous>, transform_indices = @transform_1, window_bounds = array<i64: 1, 32>}, {transform_indices = @transform_2, window_bounds = array<i64: 16, 32>}]} {
    %c0 = arith.constant 0 : index
    %c0_0 = arith.constant 0 : index
    %0 = vector.load %arg1[%c0, %c0_0] : memref<16x32xf32, #tpu.memory_space<vmem>>, vector<16x32xf32>
    %c0_1 = arith.constant 0 : index
    %c0_2 = arith.constant 0 : index
    %1 = vector.load %arg2[%c0_1, %c0_2] : memref<1x32xf32, #tpu.memory_space<vmem>>, vector<1x32xf32>
    %2 = arith.mulf %0, %0 : vector<16x32xf32>
    %cst = arith.constant dense<0.000000e+00> : vector<16xf32>
    %3 = vector.multi_reduction <add>, %2, %cst [1] : vector<16x32xf32> to vector<16xf32>
    %4 = vector.shape_cast %3 : vector<16xf32> to vector<16x1xf32>
    %cst_3 = arith.constant 3.200000e+01 : f32
    %5 = vector.broadcast %cst_3 : f32 to vector<16x1xf32>
    %6 = arith.divf %4, %5 : vector<16x1xf32>
    %cst_4 = arith.constant 9.99999997E-7 : f32
    %7 = vector.broadcast %cst_4 : f32 to vector<16x1xf32>
    %8 = arith.addf %6, %7 : vector<16x1xf32>
    %9 = math.rsqrt %8 : vector<16x1xf32>
    %10 = vector.broadcast %9 : vector<16x1xf32> to vector<16x32xf32>
    %11 = arith.mulf %0, %10 : vector<16x32xf32>
    %12 = vector.broadcast %1 : vector<1x32xf32> to vector<16x32xf32>
    %13 = arith.mulf %11, %12 : vector<16x32xf32>
    %c0_5 = arith.constant 0 : index
    %c0_6 = arith.constant 0 : index
    %14 = vector.load %arg3[%c0_5, %c0_6] : memref<16x32xf32, #tpu.memory_space<vmem>>, vector<16x32xf32>
    tpu.vector_store %arg3[%c0_5, %c0_6], %13 {strides = array<i32>} : memref<16x32xf32, #tpu.memory_space<vmem>>, vector<16x32xf32>,
    return
  }
  func.func @transform_0(%arg0: i32) -> (i32, i32) {
    %c0_i32 = arith.constant 0 : i32
    %c0_i32_0 = arith.constant 0 : i32
    return %arg0, %c0_i32 : i32, i32
  }
  func.func @transform_1(%arg0: i32) -> (i32, i32) {
    %c0_i32 = arith.constant 0 : i32
    %c0_i32_0 = arith.constant 0 : i32
    %c0_i32_1 = arith.constant 0 : i32
    return %c0_i32, %c0_i32_0 : i32, i32
  }
  func.func @transform_2(%arg0: i32) -> (i32, i32) {
    %c0_i32 = arith.constant 0 : i32
    %c0_i32_0 = arith.constant 0 : i32
    return %arg0, %c0_i32 : i32, i32
  }
}

</mosaic_0001>

<llo_original>
// kernel: tpu_custom_call.1
$region0: #{tpu_custom_call.1}
  #allocation0 [shape = 'u32[]', space=smem, size = 0x4, offset = 0x4, fixed_abs, tag = 'smem constant byte address 0x4 - core index']
  #allocation1 [shape = 'u32[144,128]{1,0:T(1,128)}', space=vmem, size = 0x12000, scoped, tag = 'internal scratch']
  %s0 = inlined_call_operand.hbm [shape: f32[16,32], index: 0, kind: input, shape index: {}]
  %s1 = inlined_call_operand.vmem [shape: f32[1,32], index: 1, kind: input, shape index: {}]
  %s2 = inlined_call_operand.hbm [shape: f32[16,32], index: 2, kind: output, shape index: {}]
  %s3 = sld [smem:[#allocation0]]
  $region22: #{tpu_custom_call.1} parent=0
    _
  %s5 = ssub.s32 1, %s3
  %s6 = scalar_select 0, %s5, %s3
  $region1: #{tpu_custom_call.1} parent=0
    #allocation2 [shape = 'u8[8192]{0}', space=vmem, size = 0x2000, scoped, tag = 'input window, operand 0, single buffered']
    #allocation3 [shape = 's32[1]{0}', space=sflag, size = 0x4, scoped, tag = 'scoped memory for tpu_custom_call.1']
    #allocation4 [shape = 's32[1]{0}', space=sflag, size = 0x4, scoped, tag = 'scoped memory for tpu_custom_call.1']
    #allocation5 [shape = 'u8[8192]{0}', space=vmem, size = 0x2000, scoped, tag = 'output window, operand 0, single buffered']
    %7 = vsyncpa [#allocation3], 0
    %8 = vsyncpa [#allocation4], 0
    // Predicated region
    $region2: #{tpu_custom_call.1} parent=1 // pred_check
      _
    $region3: #{tpu_custom_call.1} parent=1 // pred_check_branch
      %10 = sbr.rel (0) target = $region5
    $region4: #{tpu_custom_call.1} parent=1 // pred_region
      %s12 = ssub.s32 256, 256
      %13 = vsyncadd [#allocation3], %s12
      %s14 = sshll.u32 [#allocation2], 4
      %s15 = int_to_ptr.vmem [resolvable:$true] %s14
      %20 = dma.hbm_to_vmem [thread:$0]  %s0, 256, %s15, [#allocation3], 128, 128, 8
    $region5: #{tpu_custom_call.1} parent=1 // pred_fallthru
      _
    // Predicated region
    $region6: #{tpu_custom_call.1} parent=1 // pred_check
      _
    $region7: #{tpu_custom_call.1} parent=1 // pred_check_branch
      %22 = sbr.rel (0) target = $region9
    $region8: #{tpu_custom_call.1} parent=1 // pred_region
      _
    $region9: #{tpu_custom_call.1} parent=1 // pred_fallthru
      _
    // Predicated region
    $region10: #{tpu_custom_call.1} parent=1 // pred_check
      _
    $region11: #{tpu_custom_call.1} parent=1 // pred_check_branch
      %24 = sbr.rel (0) target = $region13
    $region12: #{tpu_custom_call.1} parent=1 // pred_region
      %25 = dma.done [#allocation3], 256
    $region13: #{tpu_custom_call.1} parent=1 // pred_fallthru
      _
    %v26 = vld [vmem:[#allocation2] sm:$0xff]
    %v27 = vld [vmem:[#allocation2 + $0x8] sm:$0xff]
    %v28 = vld [vmem:[%s1] sm:$0x1]
    %v29 = vmul.f32 %v26, %v26
    %v30 = vmul.f32 %v27, %v27
    %vm31 = vcmask 261120
    %v32 = vsel %vm31, %v29, 0.0
    %33 = vadd.xlane.f32.xlu0 %v32
    %v34 = vpop.xlane.xlu0 %33
    %v35 = vsel %vm31, %v30, 0.0
    %36 = vadd.xlane.f32.xlu0 %v35
    %v37 = vpop.xlane.xlu0 %36
    %v38 = vrcp.pop 32.0
    %v39 = vmul.f32 %v34, %v38
    %v40 = vmul.f32 %v37, %v38
    %v41 = vadd.f32 %v39, 1e-06
    %v42 = vadd.f32 %v40, 1e-06
    %v43 = vrsqrt.pop %v41
    %v44 = vrsqrt.pop %v42
    %v45 = vmul.f32 %v26, %v43
    %v46 = vmul.f32 %v27, %v44
    %v48 = vlaneseq
    %v49 = vshrl.u32 %v48, 7
    %v50 = vsub.s32 0, %v49
    %v51 = vrot.slane %v28, %v50
    %v53 = vmul.f32 %v45, %v51
    %v54 = vmul.f32 %v46, %v51
    %55 = vst.msk [vmem:[#allocation5] sm:$0xff] %vm31, %v53
    %56 = vst.msk [vmem:[#allocation5 + $0x8] sm:$0xff] %vm31, %v54
    // Predicated region
    $region14: #{tpu_custom_call.1} parent=1 // pred_check
      _
    $region15: #{tpu_custom_call.1} parent=1 // pred_check_branch
      %58 = sbr.rel (0) target = $region17
    $region16: #{tpu_custom_call.1} parent=1 // pred_region
      %s60 = ssub.s32 256, 256
      %61 = vsyncadd [#allocation4], %s60
      %s62 = sshll.u32 [#allocation5], 4
      %s63 = int_to_ptr.vmem [resolvable:$true] %s62
      %68 = dma.vmem_to_hbm [thread:$0]  %s63, 256, %s2, [#allocation4], 128, 128, 8
    $region17: #{tpu_custom_call.1} parent=1 // pred_fallthru
      _
    // Predicated region
    $region18: #{tpu_custom_call.1} parent=1 // pred_check
      _
    $region19: #{tpu_custom_call.1} parent=1 // pred_check_branch
      %70 = sbr.rel (0) target = $region21
    $region20: #{tpu_custom_call.1} parent=1 // pred_region
      %71 = dma.done [#allocation4], 256
    $region21: #{tpu_custom_call.1} parent=1 // pred_fallthru
      _
    %72 = vsyncpa [#allocation3], 1
    %73 = vsyncpa [#allocation4], 1

</llo_original>
